<compile_context>
chip_gen: v5e
topology: v5e:2x2
jax: 0.10.0
libtpu: 0.0.40
codegen_flags: <defaults>
</compile_context>

<pallas_src>
import jax
import jax.numpy as jnp
from jax import lax
from jax.experimental import pallas as pl
from jax.experimental.pallas import tpu as pltpu


# ============================================================================ kernels
def gate_precompute_kernel(a_ref, x_ref, w_ref, b_ref, g_ref):
    """Fully parallel pass: G_t = (A_hat @ X_t) @ W_zrh + b for a chunk of timesteps.

    a_ref: (tile_m, Np)      row tile of A_hat (resident across the time-chunk axis)
    x_ref: (Tc, Np, Fi_p)    chunk of timesteps of node features
    w_ref: (Fi_p, 3*Fp)      folded + packed gate weights  [Wz@Lz1 | Wr@Lr1 | Wh@Lh1]
    b_ref: (1, 3*Fp)         folded + packed gate biases
    g_ref: (Tc, tile_m, 3*Fp) output pre-activations (f32)
    """
    A = a_ref[...]
    W = w_ref[...]
    b = b_ref[...]
    Tc = x_ref.shape[0]

    def body(t, carry):
        # Graph aggregation first (N*N*Fi_p), then the folded gate projection (N*Fi_p*3Fp).
        AX = jnp.dot(A, x_ref[t], preferred_element_type=jnp.float32)       # (tile_m, Fi_p)
        g_ref[t] = jnp.dot(AX.astype(W.dtype), W,
                           preferred_element_type=jnp.float32) + b          # (tile_m, 3*Fp)
        return carry

    lax.fori_loop(0, Tc, body, 0, unroll=True)


def tgcn_recurrence_kernel(g_ref, h0_ref, l2zr_ref, lh2_ref, h_out_ref, h_scratch):
    """Sequential GRU recurrence over a chunk of timesteps; H carried in VMEM scratch.

    Once G is precomputed, the recurrence is row-local, so the node-row grid axis is
    "parallel" and the time-chunk axis ("arbitrary") carries state via h_scratch.
    """
    c = pl.program_id(1)                 # time-chunk index (innermost, sequential)
    Fp = lh2_ref.shape[0]
    Tc = g_ref.shape[0]

    @pl.when(c == 0)
    def _():
        h_scratch[...] = h0_ref[...]

    L2 = l2zr_ref[...]                   # (Fp, 2*Fp)   [Lz2 | Lr2]
    L3 = lh2_ref[...]                    # (Fp, Fp)     Lh2

    def step(t, H):
        G = g_ref[t]                                                         # (tm, 3*Fp) f32
        HL = jnp.dot(H.astype(L2.dtype), L2, preferred_element_type=jnp.float32)
        Z = jax.nn.sigmoid(G[:, :Fp] + HL[:, :Fp])
        R = jax.nn.sigmoid(G[:, Fp:2 * Fp] + HL[:, Fp:2 * Fp])
        H_tilde = jnp.tanh(
            G[:, 2 * Fp:]
            + jnp.dot((H * R).astype(L3.dtype), L3, preferred_element_type=jnp.float32))
        H_new = H_tilde + Z * (H - H_tilde)        # == Z*H + (1-Z)*H_tilde, one op cheaper
        h_out_ref[t] = H_new
        return H_new

    h_scratch[...] = lax.fori_loop(0, Tc, step, h_scratch[...], unroll=True)


# ============================================================================ wrapper
def _round_up(x, m):
    return (x + m - 1) // m * m


def _pad2(a, rows, cols):
    return jnp.pad(a, ((0, rows - a.shape[0]), (0, cols - a.shape[1])))


def _vmem_limit(block_bytes):
    """Scoped-VMEM limit: double-buffered blocks + headroom, clamped to sane bounds."""
    need = 2 * block_bytes + (4 << 20)
    return int(min(max(need, 16 << 20), 100 << 20))


def pack_params(params, fi_p, fp, compute_dtype):
    """Fold GCN conv weights into the gate linears and pack into lane-dense slabs."""
    ws, bs = [], []
    for g in ("z", "r", "h"):
        Wg = params[f"W{g}"] @ params[f"L{g}1"]                       # (F_in, F_out)
        bg = params[f"b{g}"] @ params[f"L{g}1"] + params[f"bl{g}"]    # (1,    F_out)
        ws.append(_pad2(Wg, fi_p, fp))
        bs.append(_pad2(bg, 1, fp))
    W_zrh = jnp.concatenate(ws, axis=1).astype(compute_dtype)        # (Fi_p, 3*Fp)
    b_zrh = jnp.concatenate(bs, axis=1).astype(jnp.float32)          # (1,    3*Fp)
    L2_zr = jnp.concatenate([_pad2(params["Lz2"], fp, fp),
                             _pad2(params["Lr2"], fp, fp)],
                            axis=1).astype(compute_dtype)            # (Fp, 2*Fp)
    Lh2 = _pad2(params["Lh2"], fp, fp).astype(compute_dtype)         # (Fp, Fp)
    return W_zrh, b_zrh, L2_zr, Lh2


def tgcn_pallas_sequence(A_hat, X_seq, H0, params, *,
                         compute_dtype=jnp.float32, t_chunk=8, tile_m=256):
    """Run T TGCN-GRU steps: one parallel pre-activation pass + one sequential recurrence.

    Returns the hidden state after every step, shape (T, N, F_out) in float32.
    """
    T, N, F_in = X_seq.shape
    F_out = H0.shape[1]

    # --- padded / tiled sizes ---
    Np0 = _round_up(N, 8)
    tile_m = _round_up(min(tile_m, Np0), 8)        # node-row tile (sublane aligned)
    Np = _round_up(Np0, tile_m)
    Fi_p = _round_up(F_in, 128)                    # lane-dense input features
    Fp = _round_up(F_out, 128)                     # lane-dense hidden / gate width
    Tc = max(1, min(t_chunk, T))                   # timesteps per grid iteration
    Tp = _round_up(T, Tc)
    n_row, n_chk = Np // tile_m, Tp // Tc

    # --- pad + cast operands ---
    A_p = _pad2(A_hat.astype(jnp.float32), Np, Np).astype(compute_dtype)
    X_p = jnp.pad(X_seq.astype(jnp.float32),
                  ((0, Tp - T), (0, Np - N), (0, Fi_p - F_in))).astype(compute_dtype)
    H0_p = _pad2(H0.astype(jnp.float32), Np, Fp)
    W_zrh, b_zrh, L2_zr, Lh2 = pack_params(params, Fi_p, Fp, compute_dtype)

    csz = jnp.dtype(compute_dtype).itemsize

    # ---------------- pass 1: H-independent gate pre-activations (fully parallel) --------
    pre_block_bytes = (tile_m * Np * csz            # A row tile
                       + Tc * Np * Fi_p * csz       # X chunk
                       + Fi_p * 3 * Fp * csz        # W_zrh
                       + 3 * Fp * 4                 # b_zrh
                       + Tc * tile_m * 3 * Fp * 4)  # G out
    G_seq = pl.pallas_call(
        gate_precompute_kernel,
        out_shape=jax.ShapeDtypeStruct((Tp, Np, 3 * Fp), jnp.float32),
        grid_spec=pltpu.PrefetchScalarGridSpec(
            num_scalar_prefetch=0,
            grid=(n_row, n_chk),
            in_specs=[
                pl.BlockSpec((tile_m, Np), lambda r, c: (r, 0)),        # A_hat row tile
                pl.BlockSpec((Tc, Np, Fi_p), lambda r, c: (c, 0, 0)),   # X chunk (streamed)
                pl.BlockSpec((Fi_p, 3 * Fp), lambda r, c: (0, 0)),      # folded gate weights
                pl.BlockSpec((1, 3 * Fp), lambda r, c: (0, 0)),         # folded gate biases
            ],
            out_specs=pl.BlockSpec((Tc, tile_m, 3 * Fp), lambda r, c: (c, r, 0)),
        ),
        compiler_params=pltpu.CompilerParams(
            dimension_semantics=("parallel", "parallel"),
            vmem_limit_bytes=_vmem_limit(pre_block_bytes)),
    )(A_p, X_p, W_zrh, b_zrh)

    # ---------------- pass 2: sequential GRU recurrence (row-local) ----------------------
    rec_block_bytes = (Tc * tile_m * 3 * Fp * 4     # G chunk
                       + tile_m * Fp * 4            # H0 tile
                       + Fp * 2 * Fp * csz          # [Lz2|Lr2]
                       + Fp * Fp * csz              # Lh2
                       + Tc * tile_m * Fp * 4       # H out chunk
                       + tile_m * Fp * 4)           # scratch
    H_out = pl.pallas_call(
        tgcn_recurrence_kernel,
        out_shape=jax.ShapeDtypeStruct((Tp, Np, Fp), jnp.float32),
        grid_spec=pltpu.PrefetchScalarGridSpec(
            num_scalar_prefetch=0,
            grid=(n_row, n_chk),
            in_specs=[
                pl.BlockSpec((Tc, tile_m, 3 * Fp), lambda r, c: (c, r, 0)),  # G chunk
                pl.BlockSpec((tile_m, Fp), lambda r, c: (r, 0)),             # H0 tile
                pl.BlockSpec((Fp, 2 * Fp), lambda r, c: (0, 0)),             # [Lz2|Lr2]
                pl.BlockSpec((Fp, Fp), lambda r, c: (0, 0)),                 # Lh2
            ],
            out_specs=pl.BlockSpec((Tc, tile_m, Fp), lambda r, c: (c, r, 0)),
            scratch_shapes=[pltpu.VMEM((tile_m, Fp), jnp.float32)],          # carried H
        ),
        compiler_params=pltpu.CompilerParams(
            # node-row axis independent -> parallel (megacore); time carries state -> arbitrary
            dimension_semantics=("parallel", "arbitrary"),
            vmem_limit_bytes=_vmem_limit(rec_block_bytes)),
    )(G_seq, H0_p, L2_zr, Lh2)

    return H_out[:T, :N, :F_out]


def tgcn_pallas(A_hat, X, H, params, **kwargs):
    """Single-step forward, matching the PyTorch module's forward signature."""
    if H is None:
        H = jnp.zeros((X.shape[0], params["Lz2"].shape[0]), jnp.float32)
    return tgcn_pallas_sequence(A_hat, X[None], H, params, **kwargs)[0]


# ============================================================================ glue (plain JAX)
def gcn_normalize(edge_index, edge_weight, num_nodes, improved=False, add_self_loops=True):
    """Dense D^-1/2 (A [+ I]) D^-1/2, matching PyG gcn_norm semantics."""
    src, dst = edge_index[0], edge_index[1]
    A = jnp.zeros((num_nodes, num_nodes), jnp.float32)
    A = A.at[dst, src].add(edge_weight)          # message flows src -> dst
    if add_self_loops:
        fill = 2.0 if improved else 1.0
        A = A + fill * jnp.eye(num_nodes, dtype=jnp.float32)
    deg = A.sum(axis=1)
    d_inv_sqrt = jnp.where(deg > 0, 1.0 / jnp.sqrt(deg), 0.0)
    return d_inv_sqrt[:, None] * A * d_inv_sqrt[None, :]


def init_params(key, in_channels, out_channels):
    ks = jax.random.split(key, 12)
    s_conv = 1.0 / jnp.sqrt(jnp.float32(in_channels))
    s_lin = 1.0 / jnp.sqrt(jnp.float32(2 * out_channels))

    def u(k, shape, s):
        return jax.random.uniform(k, shape, jnp.float32, -s, s)

    p = {}
    for i, g in enumerate(("z", "r", "h")):
        p[f"W{g}"] = u(ks[i], (in_channels, out_channels), s_conv)     # GCNConv weight
        p[f"b{g}"] = u(ks[3 + i], (1, out_channels), s_conv)           # GCNConv bias
        wt = u(ks[6 + i], (2 * out_channels, out_channels), s_lin)     # Linear W^T
        p[f"L{g}1"] = wt[:out_channels]                                # applied to conv out
        p[f"L{g}2"] = wt[out_channels:]                                # applied to H
        p[f"bl{g}"] = u(ks[9 + i], (1, out_channels), s_lin)           # Linear bias
    return p


def tgcn_reference(A_hat, X, H, p):
    """Pure-JAX mirror of the PyTorch forward (single step), for verification."""
    def gcn(W, b):
        return A_hat @ (X @ W) + b
    Z = jax.nn.sigmoid(gcn(p["Wz"], p["bz"]) @ p["Lz1"] + H @ p["Lz2"] + p["blz"])
    R = jax.nn.sigmoid(gcn(p["Wr"], p["br"]) @ p["Lr1"] + H @ p["Lr2"] + p["blr"])
    Ht = jnp.tanh(gcn(p["Wh"], p["bh"]) @ p["Lh1"] + (H * R) @ p["Lh2"] + p["blh"])
    return Z * H + (1.0 - Z) * Ht


# ============================================================================ main
if __name__ == "__main__":
    key = jax.random.PRNGKey(0)
    k_x, k_h, k_e, k_w, k_p = jax.random.split(key, 5)

    num_nodes = 16
    in_channels = 8
    out_channels = 16
    num_edges = 40
    T = 8

    X_seq = jax.random.normal(k_x, (T, num_nodes, in_channels), jnp.float32)
    H0 = jax.random.normal(k_h, (num_nodes, out_channels), jnp.float32)
    edge_index = jax.random.randint(k_e, (2, num_edges), 0, num_nodes)
    edge_weight = jax.random.uniform(k_w, (num_edges,), jnp.float32, 0.1, 1.0)

    params = init_params(k_p, in_channels, out_channels)
    A_hat = gcn_normalize(edge_index, edge_weight, num_nodes)

    # Pure-JAX reference: iterate the single-step cell in f32.
    H_ref = H0
    refs = []
    for t in range(T):
        H_ref = tgcn_reference(A_hat, X_seq[t], H_ref, params)
        refs.append(H_ref)
    H_ref_seq = jnp.stack(refs)

    # --- f32 path: parallel pre-activation pass + chunked sequential recurrence ---
    H_seq = jax.block_until_ready(tgcn_pallas_sequence(A_hat, X_seq, H0, params))
    assert jnp.allclose(H_seq, H_ref_seq, atol=1e-4, rtol=1e-4), "f32 sequence mismatch"

    # --- single-step path (the module's forward signature) ---
    H1 = jax.block_until_ready(tgcn_pallas(A_hat, X_seq[0], H0, params))
    assert jnp.allclose(H1, H_ref_seq[0], atol=1e-4, rtol=1e-4), "single-step mismatch"

    # --- bf16 MXU-input path (f32 accumulation + f32 elementwise gating) ---
    H_bf16 = jax.block_until_ready(
        tgcn_pallas_sequence(A_hat, X_seq, H0, params, compute_dtype=jnp.bfloat16))
    max_err = float(jnp.max(jnp.abs(H_bf16 - H_ref_seq)))
    assert max_err < 0.15, f"bf16 sequence mismatch vs reference (max abs err {max_err})"

    print("KERNEL_OK")
</pallas_src>

<mosaic_0001>
module attributes {stable_mosaic.version = 11 : i64} {
  func.func @gate_precompute_kernel(%arg0: i32, %arg1: i32, %arg2: memref<16x16xf32, #tpu.memory_space<vmem>>, %arg3: memref<8x16x128xf32, #tpu.memory_space<vmem>>, %arg4: memref<128x384xf32, #tpu.memory_space<vmem>>, %arg5: memref<1x384xf32, #tpu.memory_space<vmem>>, %arg6: memref<8x16x384xf32, #tpu.memory_space<vmem>>) attributes {dimension_semantics = [#tpu.dimension_semantics<parallel>, #tpu.dimension_semantics<parallel>], iteration_bounds = array<i64: 1, 1>, scalar_prefetch = 0 : i64, scratch_operands = 0 : i64, tpu.core_type = #tpu.core_type<tc>, window_params = [{transform_indices = @transform_0, window_bounds = array<i64: 16, 16>}, {transform_indices = @transform_1, window_bounds = array<i64: 8, 16, 128>}, {pipeline_mode = #tpu.pipeline_mode<synchronous>, transform_indices = @transform_2, window_bounds = array<i64: 128, 384>}, {pipeline_mode = #tpu.pipeline_mode<synchronous>, transform_indices = @transform_3, window_bounds = array<i64: 1, 384>}, {transform_indices = @transform_4, window_bounds = array<i64: 8, 16, 384>}]} {
    %c0 = arith.constant 0 : index
    %c0_0 = arith.constant 0 : index
    %0 = vector.load %arg2[%c0, %c0_0] : memref<16x16xf32, #tpu.memory_space<vmem>>, vector<16x16xf32>
    %c0_1 = arith.constant 0 : index
    %c0_2 = arith.constant 0 : index
    %1 = vector.load %arg4[%c0_1, %c0_2] : memref<128x384xf32, #tpu.memory_space<vmem>>, vector<128x384xf32>
    %c0_3 = arith.constant 0 : index
    %c0_4 = arith.constant 0 : index
    %2 = vector.load %arg5[%c0_3, %c0_4] : memref<1x384xf32, #tpu.memory_space<vmem>>, vector<1x384xf32>
    %c0_i32 = arith.constant 0 : i32
    %3 = arith.index_cast %c0_i32 : i32 to index
    %c0_5 = arith.constant 0 : index
    %c0_6 = arith.constant 0 : index
    %4 = vector.load %arg3[%3, %c0_5, %c0_6] : memref<8x16x128xf32, #tpu.memory_space<vmem>>, vector<1x16x128xf32>
    %5 = vector.shape_cast %4 : vector<1x16x128xf32> to vector<16x128xf32>
    %cst = arith.constant dense<0.000000e+00> : vector<16x128xf32>
    %6 = tpu.matmul %0, %5, %cst {dimension_numbers = #tpu.dot_dimension_numbers<[1], [0], [0], [1], [0, 0, 1, 1], [], []>} : vector<16x16xf32>, vector<16x128xf32>, vector<16x128xf32> -> vector<16x128xf32>
    %cst_7 = arith.constant dense<0.000000e+00> : vector<16x384xf32>
    %7 = tpu.matmul %6, %1, %cst_7 {dimension_numbers = #tpu.dot_dimension_numbers<[1], [0], [0], [1], [0, 0, 1, 1], [], []>} : vector<16x128xf32>, vector<128x384xf32>, vector<16x384xf32> -> vector<16x384xf32>
    %8 = vector.broadcast %2 : vector<1x384xf32> to vector<16x384xf32>
    %9 = arith.addf %7, %8 : vector<16x384xf32>
    %10 = arith.index_cast %c0_i32 : i32 to index
    %c0_8 = arith.constant 0 : index
    %c0_9 = arith.constant 0 : index
    %11 = vector.load %arg6[%10, %c0_8, %c0_9] : memref<8x16x384xf32, #tpu.memory_space<vmem>>, vector<1x16x384xf32>
    %12 = vector.shape_cast %11 : vector<1x16x384xf32> to vector<16x384xf32>
    %13 = vector.shape_cast %9 : vector<16x384xf32> to vector<1x16x384xf32>
    tpu.vector_store %arg6[%10, %c0_8, %c0_9], %13 {strides = array<i32>} : memref<8x16x384xf32, #tpu.memory_space<vmem>>, vector<1x16x384xf32>,
    %c1_i32 = arith.constant 1 : i32
    %14 = arith.index_cast %c1_i32 : i32 to index
    %c0_10 = arith.constant 0 : index
    %c0_11 = arith.constant 0 : index
    %15 = vector.load %arg3[%14, %c0_10, %c0_11] : memref<8x16x128xf32, #tpu.memory_space<vmem>>, vector<1x16x128xf32>
    %16 = vector.shape_cast %15 : vector<1x16x128xf32> to vector<16x128xf32>
    %cst_12 = arith.constant dense<0.000000e+00> : vector<16x128xf32>
    %17 = tpu.matmul %0, %16, %cst_12 {dimension_numbers = #tpu.dot_dimension_numbers<[1], [0], [0], [1], [0, 0, 1, 1], [], []>} : vector<16x16xf32>, vector<16x128xf32>, vector<16x128xf32> -> vector<16x128xf32>
    %cst_13 = arith.constant dense<0.000000e+00> : vector<16x384xf32>
    %18 = tpu.matmul %17, %1, %cst_13 {dimension_numbers = #tpu.dot_dimension_numbers<[1], [0], [0], [1], [0, 0, 1, 1], [], []>} : vector<16x128xf32>, vector<128x384xf32>, vector<16x384xf32> -> vector<16x384xf32>
    %19 = vector.broadcast %2 : vector<1x384xf32> to vector<16x384xf32>
    %20 = arith.addf %18, %19 : vector<16x384xf32>
    %21 = arith.index_cast %c1_i32 : i32 to index
    %c0_14 = arith.constant 0 : index
    %c0_15 = arith.constant 0 : index
    %22 = vector.load %arg6[%21, %c0_14, %c0_15] : memref<8x16x384xf32, #tpu.memory_space<vmem>>, vector<1x16x384xf32>
    %23 = vector.shape_cast %22 : vector<1x16x384xf32> to vector<16x384xf32>
    %24 = vector.shape_cast %20 : vector<16x384xf32> to vector<1x16x384xf32>
    tpu.vector_store %arg6[%21, %c0_14, %c0_15], %24 {strides = array<i32>} : memref<8x16x384xf32, #tpu.memory_space<vmem>>, vector<1x16x384xf32>,
    %c2_i32 = arith.constant 2 : i32
    %25 = arith.index_cast %c2_i32 : i32 to index
    %c0_16 = arith.constant 0 : index
    %c0_17 = arith.constant 0 : index
    %26 = vector.load %arg3[%25, %c0_16, %c0_17] : memref<8x16x128xf32, #tpu.memory_space<vmem>>, vector<1x16x128xf32>
    %27 = vector.shape_cast %26 : vector<1x16x128xf32> to vector<16x128xf32>
    %cst_18 = arith.constant dense<0.000000e+00> : vector<16x128xf32>
    %28 = tpu.matmul %0, %27, %cst_18 {dimension_numbers = #tpu.dot_dimension_numbers<[1], [0], [0], [1], [0, 0, 1, 1], [], []>} : vector<16x16xf32>, vector<16x128xf32>, vector<16x128xf32> -> vector<16x128xf32>
    %cst_19 = arith.constant dense<0.000000e+00> : vector<16x384xf32>
    %29 = tpu.matmul %28, %1, %cst_19 {dimension_numbers = #tpu.dot_dimension_numbers<[1], [0], [0], [1], [0, 0, 1, 1], [], []>} : vector<16x128xf32>, vector<128x384xf32>, vector<16x384xf32> -> vector<16x384xf32>
    %30 = vector.broadcast %2 : vector<1x384xf32> to vector<16x384xf32>
    %31 = arith.addf %29, %30 : vector<16x384xf32>
    %32 = arith.index_cast %c2_i32 : i32 to index
    %c0_20 = arith.constant 0 : index
    %c0_21 = arith.constant 0 : index
    %33 = vector.load %arg6[%32, %c0_20, %c0_21] : memref<8x16x384xf32, #tpu.memory_space<vmem>>, vector<1x16x384xf32>
    %34 = vector.shape_cast %33 : vector<1x16x384xf32> to vector<16x384xf32>
    %35 = vector.shape_cast %31 : vector<16x384xf32> to vector<1x16x384xf32>
    tpu.vector_store %arg6[%32, %c0_20, %c0_21], %35 {strides = array<i32>} : memref<8x16x384xf32, #tpu.memory_space<vmem>>, vector<1x16x384xf32>,
    %c3_i32 = arith.constant 3 : i32
    %36 = arith.index_cast %c3_i32 : i32 to index
    %c0_22 = arith.constant 0 : index
    %c0_23 = arith.constant 0 : index
    %37 = vector.load %arg3[%36, %c0_22, %c0_23] : memref<8x16x128xf32, #tpu.memory_space<vmem>>, vector<1x16x128xf32>
    %38 = vector.shape_cast %37 : vector<1x16x128xf32> to vector<16x128xf32>
    %cst_24 = arith.constant dense<0.000000e+00> : vector<16x128xf32>
    %39 = tpu.matmul %0, %38, %cst_24 {dimension_numbers = #tpu.dot_dimension_numbers<[1], [0], [0], [1], [0, 0, 1, 1], [], []>} : vector<16x16xf32>, vector<16x128xf32>, vector<16x128xf32> -> vector<16x128xf32>
    %cst_25 = arith.constant dense<0.000000e+00> : vector<16x384xf32>
    %40 = tpu.matmul %39, %1, %cst_25 {dimension_numbers = #tpu.dot_dimension_numbers<[1], [0], [0], [1], [0, 0, 1, 1], [], []>} : vector<16x128xf32>, vector<128x384xf32>, vector<16x384xf32> -> vector<16x384xf32>
    %41 = vector.broadcast %2 : vector<1x384xf32> to vector<16x384xf32>
    %42 = arith.addf %40, %41 : vector<16x384xf32>
    %43 = arith.index_cast %c3_i32 : i32 to index
    %c0_26 = arith.constant 0 : index
    %c0_27 = arith.constant 0 : index
    %44 = vector.load %arg6[%43, %c0_26, %c0_27] : memref<8x16x384xf32, #tpu.memory_space<vmem>>, vector<1x16x384xf32>
    %45 = vector.shape_cast %44 : vector<1x16x384xf32> to vector<16x384xf32>
    %46 = vector.shape_cast %42 : vector<16x384xf32> to vector<1x16x384xf32>
    tpu.vector_store %arg6[%43, %c0_26, %c0_27], %46 {strides = array<i32>} : memref<8x16x384xf32, #tpu.memory_space<vmem>>, vector<1x16x384xf32>,
    %c4_i32 = arith.constant 4 : i32
    %47 = arith.index_cast %c4_i32 : i32 to index
    %c0_28 = arith.constant 0 : index
    %c0_29 = arith.constant 0 : index
    %48 = vector.load %arg3[%47, %c0_28, %c0_29] : memref<8x16x128xf32, #tpu.memory_space<vmem>>, vector<1x16x128xf32>
    %49 = vector.shape_cast %48 : vector<1x16x128xf32> to vector<16x128xf32>
    %cst_30 = arith.constant dense<0.000000e+00> : vector<16x128xf32>
    %50 = tpu.matmul %0, %49, %cst_30 {dimension_numbers = #tpu.dot_dimension_numbers<[1], [0], [0], [1], [0, 0, 1, 1], [], []>} : vector<16x16xf32>, vector<16x128xf32>, vector<16x128xf32> -> vector<16x128xf32>
    %cst_31 = arith.constant dense<0.000000e+00> : vector<16x384xf32>
    %51 = tpu.matmul %50, %1, %cst_31 {dimension_numbers = #tpu.dot_dimension_numbers<[1], [0], [0], [1], [0, 0, 1, 1], [], []>} : vector<16x128xf32>, vector<128x384xf32>, vector<16x384xf32> -> vector<16x384xf32>
    %52 = vector.broadcast %2 : vector<1x384xf32> to vector<16x384xf32>
    %53 = arith.addf %51, %52 : vector<16x384xf32>
    %54 = arith.index_cast %c4_i32 : i32 to index
    %c0_32 = arith.constant 0 : index
    %c0_33 = arith.constant 0 : index
    %55 = vector.load %arg6[%54, %c0_32, %c0_33] : memref<8x16x384xf32, #tpu.memory_space<vmem>>, vector<1x16x384xf32>
    %56 = vector.shape_cast %55 : vector<1x16x384xf32> to vector<16x384xf32>
    %57 = vector.shape_cast %53 : vector<16x384xf32> to vector<1x16x384xf32>
    tpu.vector_store %arg6[%54, %c0_32, %c0_33], %57 {strides = array<i32>} : memref<8x16x384xf32, #tpu.memory_space<vmem>>, vector<1x16x384xf32>,
    %c5_i32 = arith.constant 5 : i32
    %58 = arith.index_cast %c5_i32 : i32 to index
    %c0_34 = arith.constant 0 : index
    %c0_35 = arith.constant 0 : index
    %59 = vector.load %arg3[%58, %c0_34, %c0_35] : memref<8x16x128xf32, #tpu.memory_space<vmem>>, vector<1x16x128xf32>
    %60 = vector.shape_cast %59 : vector<1x16x128xf32> to vector<16x128xf32>
    %cst_36 = arith.constant dense<0.000000e+00> : vector<16x128xf32>
    %61 = tpu.matmul %0, %60, %cst_36 {dimension_numbers = #tpu.dot_dimension_numbers<[1], [0], [0], [1], [0, 0, 1, 1], [], []>} : vector<16x16xf32>, vector<16x128xf32>, vector<16x128xf32> -> vector<16x128xf32>
    %cst_37 = arith.constant dense<0.000000e+00> : vector<16x384xf32>
    %62 = tpu.matmul %61, %1, %cst_37 {dimension_numbers = #tpu.dot_dimension_numbers<[1], [0], [0], [1], [0, 0, 1, 1], [], []>} : vector<16x128xf32>, vector<128x384xf32>, vector<16x384xf32> -> vector<16x384xf32>
    %63 = vector.broadcast %2 : vector<1x384xf32> to vector<16x384xf32>
    %64 = arith.addf %62, %63 : vector<16x384xf32>
    %65 = arith.index_cast %c5_i32 : i32 to index
    %c0_38 = arith.constant 0 : index
    %c0_39 = arith.constant 0 : index
    %66 = vector.load %arg6[%65, %c0_38, %c0_39] : memref<8x16x384xf32, #tpu.memory_space<vmem>>, vector<1x16x384xf32>
    %67 = vector.shape_cast %66 : vector<1x16x384xf32> to vector<16x384xf32>
    %68 = vector.shape_cast %64 : vector<16x384xf32> to vector<1x16x384xf32>
    tpu.vector_store %arg6[%65, %c0_38, %c0_39], %68 {strides = array<i32>} : memref<8x16x384xf32, #tpu.memory_space<vmem>>, vector<1x16x384xf32>,
    %c6_i32 = arith.constant 6 : i32
    %69 = arith.index_cast %c6_i32 : i32 to index
    %c0_40 = arith.constant 0 : index
    %c0_41 = arith.constant 0 : index
    %70 = vector.load %arg3[%69, %c0_40, %c0_41] : memref<8x16x128xf32, #tpu.memory_space<vmem>>, vector<1x16x128xf32>
    %71 = vector.shape_cast %70 : vector<1x16x128xf32> to vector<16x128xf32>
    %cst_42 = arith.constant dense<0.000000e+00> : vector<16x128xf32>
    %72 = tpu.matmul %0, %71, %cst_42 {dimension_numbers = #tpu.dot_dimension_numbers<[1], [0], [0], [1], [0, 0, 1, 1], [], []>} : vector<16x16xf32>, vector<16x128xf32>, vector<16x128xf32> -> vector<16x128xf32>
    %cst_43 = arith.constant dense<0.000000e+00> : vector<16x384xf32>
    %73 = tpu.matmul %72, %1, %cst_43 {dimension_numbers = #tpu.dot_dimension_numbers<[1], [0], [0], [1], [0, 0, 1, 1], [], []>} : vector<16x128xf32>, vector<128x384xf32>, vector<16x384xf32> -> vector<16x384xf32>
    %74 = vector.broadcast %2 : vector<1x384xf32> to vector<16x384xf32>
    %75 = arith.addf %73, %74 : vector<16x384xf32>
    %76 = arith.index_cast %c6_i32 : i32 to index
    %c0_44 = arith.constant 0 : index
    %c0_45 = arith.constant 0 : index
    %77 = vector.load %arg6[%76, %c0_44, %c0_45] : memref<8x16x384xf32, #tpu.memory_space<vmem>>, vector<1x16x384xf32>
    %78 = vector.shape_cast %77 : vector<1x16x384xf32> to vector<16x384xf32>
    %79 = vector.shape_cast %75 : vector<16x384xf32> to vector<1x16x384xf32>
    tpu.vector_store %arg6[%76, %c0_44, %c0_45], %79 {strides = array<i32>} : memref<8x16x384xf32, #tpu.memory_space<vmem>>, vector<1x16x384xf32>,
    %c7_i32 = arith.constant 7 : i32
    %80 = arith.index_cast %c7_i32 : i32 to index
    %c0_46 = arith.constant 0 : index
    %c0_47 = arith.constant 0 : index
    %81 = vector.load %arg3[%80, %c0_46, %c0_47] : memref<8x16x128xf32, #tpu.memory_space<vmem>>, vector<1x16x128xf32>
    %82 = vector.shape_cast %81 : vector<1x16x128xf32> to vector<16x128xf32>
    %cst_48 = arith.constant dense<0.000000e+00> : vector<16x128xf32>
    %83 = tpu.matmul %0, %82, %cst_48 {dimension_numbers = #tpu.dot_dimension_numbers<[1], [0], [0], [1], [0, 0, 1, 1], [], []>} : vector<16x16xf32>, vector<16x128xf32>, vector<16x128xf32> -> vector<16x128xf32>
    %cst_49 = arith.constant dense<0.000000e+00> : vector<16x384xf32>
    %84 = tpu.matmul %83, %1, %cst_49 {dimension_numbers = #tpu.dot_dimension_numbers<[1], [0], [0], [1], [0, 0, 1, 1], [], []>} : vector<16x128xf32>, vector<128x384xf32>, vector<16x384xf32> -> vector<16x384xf32>
    %85 = vector.broadcast %2 : vector<1x384xf32> to vector<16x384xf32>
    %86 = arith.addf %84, %85 : vector<16x384xf32>
    %87 = arith.index_cast %c7_i32 : i32 to index
    %c0_50 = arith.constant 0 : index
    %c0_51 = arith.constant 0 : index
    %88 = vector.load %arg6[%87, %c0_50, %c0_51] : memref<8x16x384xf32, #tpu.memory_space<vmem>>, vector<1x16x384xf32>
    %89 = vector.shape_cast %88 : vector<1x16x384xf32> to vector<16x384xf32>
    %90 = vector.shape_cast %86 : vector<16x384xf32> to vector<1x16x384xf32>
    tpu.vector_store %arg6[%87, %c0_50, %c0_51], %90 {strides = array<i32>} : memref<8x16x384xf32, #tpu.memory_space<vmem>>, vector<1x16x384xf32>,
    %c8_i32 = arith.constant 8 : i32
    return
  }
  func.func @transform_0(%arg0: i32, %arg1: i32) -> (i32, i32) {
    %c0_i32 = arith.constant 0 : i32
    %c0_i32_0 = arith.constant 0 : i32
    return %arg0, %c0_i32 : i32, i32
  }
  func.func @transform_1(%arg0: i32, %arg1: i32) -> (i32, i32, i32) {
    %c0_i32 = arith.constant 0 : i32
    %c0_i32_0 = arith.constant 0 : i32
    %c0_i32_1 = arith.constant 0 : i32
    return %arg1, %c0_i32, %c0_i32_0 : i32, i32, i32
  }
  func.func @transform_2(%arg0: i32, %arg1: i32) -> (i32, i32) {
    %c0_i32 = arith.constant 0 : i32
    %c0_i32_0 = arith.constant 0 : i32
    %c0_i32_1 = arith.constant 0 : i32
    return %c0_i32, %c0_i32_0 : i32, i32
  }
  func.func @transform_3(%arg0: i32, %arg1: i32) -> (i32, i32) {
    %c0_i32 = arith.constant 0 : i32
    %c0_i32_0 = arith.constant 0 : i32
    %c0_i32_1 = arith.constant 0 : i32
    return %c0_i32, %c0_i32_0 : i32, i32
  }
  func.func @transform_4(%arg0: i32, %arg1: i32) -> (i32, i32, i32) {
    %c0_i32 = arith.constant 0 : i32
    %c0_i32_0 = arith.constant 0 : i32
    return %arg1, %arg0, %c0_i32 : i32, i32, i32
  }
}

</mosaic_0001>

<llo_original>
// kernel: tpu_custom_call.1
$region0: #{tpu_custom_call.1}
  #allocation0 [shape = 'u32[]', space=smem, size = 0x4, offset = 0x4, fixed_abs, tag = 'smem constant byte address 0x4 - core index']
  #allocation1 [shape = 'u32[72,128]{1,0:T(1,128)}', space=vmem, size = 0x9000, scoped, tag = 'internal scratch']
  %s0 = inlined_call_operand.hbm [shape: f32[16,16], index: 0, kind: input, shape index: {}]
  %s1 = inlined_call_operand.hbm [shape: f32[8,16,128], index: 1, kind: input, shape index: {}]
  %s2 = inlined_call_operand.hbm [shape: f32[128,384], index: 2, kind: input, shape index: {}]
  %s3 = inlined_call_operand.hbm [shape: f32[1,384], index: 3, kind: input, shape index: {}]
  %s4 = inlined_call_operand.hbm [shape: f32[8,16,384], index: 4, kind: output, shape index: {}]
  %s5 = sld [smem:[#allocation0]]
  $region42: #{tpu_custom_call.1} parent=0
    _
  %s7 = ssub.s32 1, %s5
  %s8 = scalar_select 0, %s7, %s5
  $region1: #{tpu_custom_call.1} parent=0
    #allocation2 [shape = 'u8[8192]{0}', space=vmem, size = 0x2000, scoped, tag = 'input window, operand 0, single buffered']
    #allocation3 [shape = 's32[1]{0}', space=sflag, size = 0x4, scoped, tag = 'scoped memory for tpu_custom_call.1']
    #allocation4 [shape = 's32[1]{0}', space=sflag, size = 0x4, scoped, tag = 'scoped memory for tpu_custom_call.1']
    #allocation5 [shape = 'u8[65536]{0}', space=vmem, size = 0x10000, scoped, tag = 'input window, operand 1, single buffered']
    #allocation6 [shape = 's32[1]{0}', space=sflag, size = 0x4, scoped, tag = 'scoped memory for tpu_custom_call.1']
    #allocation7 [shape = 'u8[196608]{0}', space=vmem, size = 0x30000, scoped, tag = 'input window, operand 2, single buffered']
    #allocation8 [shape = 'u8[1536]{0}', space=vmem, size = 0x800, scoped, tag = 'input window, operand 3, single buffered']
    #allocation9 [shape = 's32[1]{0}', space=sflag, size = 0x4, scoped, tag = 'scoped memory for tpu_custom_call.1']
    #allocation10 [shape = 'u8[196608]{0}', space=vmem, size = 0x30000, scoped, tag = 'output window, operand 0, single buffered']
    %9 = vsyncpa [#allocation3], 0
    %10 = vsyncpa [#allocation6], 0
    %11 = vsyncpa [#allocation9], 0
    %12 = vsyncpa [#allocation4], 0
    // Predicated region
    $region2: #{tpu_custom_call.1} parent=1 // pred_check
      _
    $region3: #{tpu_custom_call.1} parent=1 // pred_check_branch
      %14 = sbr.rel (0) target = $region5
    $region4: #{tpu_custom_call.1} parent=1 // pred_region
      %16 = vsyncadd [#allocation3], 0
      %s17 = sshll.u32 %s0, 4
      %s18 = int_to_ptr.hbm [resolvable:$true] %s17
      %s19 = sshll.u32 [#allocation2], 4
      %s20 = int_to_ptr.vmem [resolvable:$true] %s19
      %25 = dma.hbm_to_vmem [thread:$0]  %s18, 256, %s20, [#allocation3], 128, 128, 8
    $region5: #{tpu_custom_call.1} parent=1 // pred_fallthru
      _
    // Predicated region
    $region6: #{tpu_custom_call.1} parent=1 // pred_check
      _
    $region7: #{tpu_custom_call.1} parent=1 // pred_check_branch
      %27 = sbr.rel (0) target = $region9
    $region8: #{tpu_custom_call.1} parent=1 // pred_region
      %29 = vsyncadd [#allocation6], 0
      %s30 = sshll.u32 %s1, 4
      %s31 = int_to_ptr.hbm [resolvable:$true] %s30
      %s32 = sshll.u32 [#allocation5], 4
      %s33 = int_to_ptr.vmem [resolvable:$true] %s32
      %38 = dma.hbm_to_vmem [thread:$0]  %s31, 2048, %s33, [#allocation6], 128, 128, 8
    $region9: #{tpu_custom_call.1} parent=1 // pred_fallthru
      _
    // Predicated region
    $region10: #{tpu_custom_call.1} parent=1 // pred_check
      _
    $region11: #{tpu_custom_call.1} parent=1 // pred_check_branch
      %40 = sbr.rel (0) target = $region13
    $region12: #{tpu_custom_call.1} parent=1 // pred_region
      %42 = vsyncadd [#allocation6], 0
      %s43 = sshll.u32 %s2, 4
      %s44 = int_to_ptr.hbm [resolvable:$true] %s43
      %s45 = sshll.u32 [#allocation7], 4
      %s46 = int_to_ptr.vmem [resolvable:$true] %s45
      %51 = dma.hbm_to_vmem [thread:$0]  %s44, 6144, %s46, [#allocation6], 384, 384, 24
    $region13: #{tpu_custom_call.1} parent=1 // pred_fallthru
      _
    // Predicated region
    $region14: #{tpu_custom_call.1} parent=1 // pred_check
      _
    $region15: #{tpu_custom_call.1} parent=1 // pred_check_branch
      %53 = sbr.rel (0) target = $region17
    $region16: #{tpu_custom_call.1} parent=1 // pred_region
      %55 = vsyncadd [#allocation9], 0
      %s57 = sshll.u32 %s3, 4
      %s58 = int_to_ptr.hbm [resolvable:$true] %s57
      %s59 = sshll.u32 [#allocation8], 4
      %s60 = int_to_ptr.vmem [resolvable:$true] %s59
      %62 = dma.hbm_to_vmem [thread:$0]  %s58, 48, %s60, [#allocation9]
    $region17: #{tpu_custom_call.1} parent=1 // pred_fallthru
      _
    // Predicated region
    $region18: #{tpu_custom_call.1} parent=1 // pred_check
      _
    $region19: #{tpu_custom_call.1} parent=1 // pred_check_branch
      %64 = sbr.rel (0) target = $region21
    $region20: #{tpu_custom_call.1} parent=1 // pred_region
      %66 = dma.done [#allocation3], 256
    $region21: #{tpu_custom_call.1} parent=1 // pred_fallthru
      _
    // Predicated region
    $region22: #{tpu_custom_call.1} parent=1 // pred_check
      _
    $region23: #{tpu_custom_call.1} parent=1 // pred_check_branch
      %68 = sbr.rel (0) target = $region25
    $region24: #{tpu_custom_call.1} parent=1 // pred_region
      %70 = dma.done [#allocation6], 2048
    $region25: #{tpu_custom_call.1} parent=1 // pred_fallthru
      _
    // Predicated region
    $region26: #{tpu_custom_call.1} parent=1 // pred_check
      _
    $region27: #{tpu_custom_call.1} parent=1 // pred_check_branch
      %72 = sbr.rel (0) target = $region29
    $region28: #{tpu_custom_call.1} parent=1 // pred_region
      %74 = dma.done [#allocation6], 6144
    $region29: #{tpu_custom_call.1} parent=1 // pred_fallthru
      _
    // Predicated region
    $region30: #{tpu_custom_call.1} parent=1 // pred_check
      _
    $region31: #{tpu_custom_call.1} parent=1 // pred_check_branch
      %76 = sbr.rel (0) target = $region33
    $region32: #{tpu_custom_call.1} parent=1 // pred_region
      %78 = dma.done [#allocation9], 48
    $region33: #{tpu_custom_call.1} parent=1 // pred_fallthru
      _
    %v79 = vld [vmem:[#allocation2] sm:$0xff]
    %v80 = vld [vmem:[#allocation2 + $0x8] sm:$0xff]
    %v81 = vld [vmem:[#allocation7] sm:$0xff]
    %v82 = vld [vmem:[#allocation7 + $0x8] sm:$0xff]
    %v83 = vld [vmem:[#allocation7 + $0x10] sm:$0xff]
    %v84 = vld [vmem:[#allocation7 + $0x18] sm:$0xff]
    %v85 = vld [vmem:[#allocation7 + $0x20] sm:$0xff]
    %v86 = vld [vmem:[#allocation7 + $0x28] sm:$0xff]
    %v87 = vld [vmem:[#allocation7 + $0x30] sm:$0xff]
    %v88 = vld [vmem:[#allocation7 + $0x38] sm:$0xff]
    %v89 = vld [vmem:[#allocation7 + $0x40] sm:$0xff]
    %v90 = vld [vmem:[#allocation7 + $0x48] sm:$0xff]
    %v91 = vld [vmem:[#allocation7 + $0x50] sm:$0xff]
    %v92 = vld [vmem:[#allocation7 + $0x58] sm:$0xff]
    %v93 = vld [vmem:[#allocation7 + $0x60] sm:$0xff]
    %v94 = vld [vmem:[#allocation7 + $0x68] sm:$0xff]
    %v95 = vld [vmem:[#allocation7 + $0x70] sm:$0xff]
    %v96 = vld [vmem:[#allocation7 + $0x78] sm:$0xff]
    %v97 = vld [vmem:[#allocation7 + $0x80] sm:$0xff]
    %v98 = vld [vmem:[#allocation7 + $0x88] sm:$0xff]
    %v99 = vld [vmem:[#allocation7 + $0x90] sm:$0xff]
    %v100 = vld [vmem:[#allocation7 + $0x98] sm:$0xff]
    %v101 = vld [vmem:[#allocation7 + $0xa0] sm:$0xff]
    %v102 = vld [vmem:[#allocation7 + $0xa8] sm:$0xff]
    %v103 = vld [vmem:[#allocation7 + $0xb0] sm:$0xff]
    %v104 = vld [vmem:[#allocation7 + $0xb8] sm:$0xff]
    %v105 = vld [vmem:[#allocation7 + $0xc0] sm:$0xff]
    %v106 = vld [vmem:[#allocation7 + $0xc8] sm:$0xff]
    %v107 = vld [vmem:[#allocation7 + $0xd0] sm:$0xff]
    %v108 = vld [vmem:[#allocation7 + $0xd8] sm:$0xff]
    %v109 = vld [vmem:[#allocation7 + $0xe0] sm:$0xff]
    %v110 = vld [vmem:[#allocation7 + $0xe8] sm:$0xff]
    %v111 = vld [vmem:[#allocation7 + $0xf0] sm:$0xff]
    %v112 = vld [vmem:[#allocation7 + $0xf8] sm:$0xff]
    %v113 = vld [vmem:[#allocation7 + $0x100] sm:$0xff]
    %v114 = vld [vmem:[#allocation7 + $0x108] sm:$0xff]
    %v115 = vld [vmem:[#allocation7 + $0x110] sm:$0xff]
    %v116 = vld [vmem:[#allocation7 + $0x118] sm:$0xff]
    %v117 = vld [vmem:[#allocation7 + $0x120] sm:$0xff]
    %v118 = vld [vmem:[#allocation7 + $0x128] sm:$0xff]
    %v119 = vld [vmem:[#allocation7 + $0x130] sm:$0xff]
    %v120 = vld [vmem:[#allocation7 + $0x138] sm:$0xff]
    %v121 = vld [vmem:[#allocation7 + $0x140] sm:$0xff]
    %v122 = vld [vmem:[#allocation7 + $0x148] sm:$0xff]
    %v123 = vld [vmem:[#allocation7 + $0x150] sm:$0xff]
    %v124 = vld [vmem:[#allocation7 + $0x158] sm:$0xff]
    %v125 = vld [vmem:[#allocation7 + $0x160] sm:$0xff]
    %v126 = vld [vmem:[#allocation7 + $0x168] sm:$0xff]
    %v127 = vld [vmem:[#allocation7 + $0x170] sm:$0xff]
    %v128 = vld [vmem:[#allocation7 + $0x178] sm:$0xff]
    %v129 = vld [vmem:[#allocation8] sm:$0x7]
    %v130 = vld [vmem:[#allocation5] sm:$0xff]
    %v131 = vld [vmem:[#allocation5 + $0x8] sm:$0xff]
    %vm132 = vcmask 130048
    %v134 = vsel %vm132, %v79, 0
    %v137 = vsel %vm132, %v80, 0
    %139 = vmatpush.msra.mxu0 0.0
    %140 = vmatpush.msra.mxu0 0.0
    %141 = vmatpush.msra.mxu0 0.0
    %142 = vmatpush.msra.mxu0 0.0
    %143 = vmatpush.msra.mxu0 0.0
    %144 = vmatpush.msra.mxu0 0.0
    %145 = vmatpush.msra.mxu0 0.0
    %146 = vmatpush.msra.mxu0 0.0
    %147 = vmatpush.msra.mxu0 0.0
    %148 = vmatpush.msra.mxu0 0.0
    %149 = vmatpush.msra.mxu0 0.0
    %150 = vmatpush.msra.mxu0 0.0
    %151 = vmatpush.msra.mxu0 0.0
    %152 = vmatpush.msra.mxu0 0.0
    %153 = vmatpush.msra.mxu0 %v131
    %154 = vmatpush.msra.mxu0 %v130
    %155 = vmatmul.f32.gmra.mxu0 %v134
    %v156 = vpop.f32.mrf.mxu0
    %v157 = vadd.f32 0.0, %v156
    %158 = vmatmul.f32.gmra.mxu0 %v137
    %v159 = vpop.f32.mrf.mxu0
    %v160 = vadd.f32 0.0, %v159
    %161 = vdwg.mxu0
    %v163 = vperm.slane %v129, 0
    %v164 = vperm.slane %v129, 1
    %v165 = vperm.slane %v129, 2
    %169 = vmatpush.msra.mxu0 %v126
    %170 = vmatpush.msra.mxu0 %v123
    %171 = vmatpush.msra.mxu0 %v120
    %172 = vmatpush.msra.mxu0 %v117
    %173 = vmatpush.msra.mxu0 %v114
    %174 = vmatpush.msra.mxu0 %v111
    %175 = vmatpush.msra.mxu0 %v108
    %176 = vmatpush.msra.mxu0 %v105
    %177 = vmatpush.msra.mxu0 %v102
    %178 = vmatpush.msra.mxu0 %v99
    %179 = vmatpush.msra.mxu0 %v96
    %180 = vmatpush.msra.mxu0 %v93
    %181 = vmatpush.msra.mxu0 %v90
    %182 = vmatpush.msra.mxu0 %v87
    %183 = vmatpush.msra.mxu0 %v84
    %184 = vmatpush.msra.mxu0 %v81
    %185 = vmatmul.f32.gmra.mxu0 %v157
    %v186 = vpop.f32.mrf.mxu0
    %v187 = vadd.f32 %v163, %v186
    %188 = vmatmul.f32.gmra.mxu0 %v160
    %v189 = vpop.f32.mrf.mxu0
    %v190 = vadd.f32 %v163, %v189
    %191 = vdwg.mxu0
    %192 = vmatpush.msra.mxu0 %v127
    %193 = vmatpush.msra.mxu0 %v124
    %194 = vmatpush.msra.mxu0 %v121
    %195 = vmatpush.msra.mxu0 %v118
    %196 = vmatpush.msra.mxu0 %v115
    %197 = vmatpush.msra.mxu0 %v112
    %198 = vmatpush.msra.mxu0 %v109
    %199 = vmatpush.msra.mxu0 %v106
    %200 = vmatpush.msra.mxu0 %v103
    %201 = vmatpush.msra.mxu0 %v100
    %202 = vmatpush.msra.mxu0 %v97
    %203 = vmatpush.msra.mxu0 %v94
    %204 = vmatpush.msra.mxu0 %v91
    %205 = vmatpush.msra.mxu0 %v88
    %206 = vmatpush.msra.mxu0 %v85
    %207 = vmatpush.msra.mxu0 %v82
    %208 = vmatmul.f32.gmra.mxu0 %v157
    %v209 = vpop.f32.mrf.mxu0
    %v210 = vadd.f32 %v164, %v209
    %211 = vmatmul.f32.gmra.mxu0 %v160
    %v212 = vpop.f32.mrf.mxu0
    %v213 = vadd.f32 %v164, %v212
    %214 = vdwg.mxu0
    %215 = vmatpush.msra.mxu0 %v128
    %216 = vmatpush.msra.mxu0 %v125
    %217 = vmatpush.msra.mxu0 %v122
    %218 = vmatpush.msra.mxu0 %v119
    %219 = vmatpush.msra.mxu0 %v116
    %220 = vmatpush.msra.mxu0 %v113
    %221 = vmatpush.msra.mxu0 %v110
    %222 = vmatpush.msra.mxu0 %v107
    %223 = vmatpush.msra.mxu0 %v104
    %224 = vmatpush.msra.mxu0 %v101
    %225 = vmatpush.msra.mxu0 %v98
    %226 = vmatpush.msra.mxu0 %v95
    %227 = vmatpush.msra.mxu0 %v92
    %228 = vmatpush.msra.mxu0 %v89
    %229 = vmatpush.msra.mxu0 %v86
    %230 = vmatpush.msra.mxu0 %v83
    %231 = vmatmul.f32.gmra.mxu0 %v157
    %v232 = vpop.f32.mrf.mxu0
    %v233 = vadd.f32 %v165, %v232
    %234 = vmatmul.f32.gmra.mxu0 %v160
    %v235 = vpop.f32.mrf.mxu0
    %v236 = vadd.f32 %v165, %v235
    %237 = vdwg.mxu0
    %238 = vst [vmem:[#allocation10] sm:$0xff] %v187
    %239 = vst [vmem:[#allocation10 + $0x8] sm:$0xff] %v210
    %240 = vst [vmem:[#allocation10 + $0x10] sm:$0xff] %v233
    %241 = vst [vmem:[#allocation10 + $0x18] sm:$0xff] %v190
    %242 = vst [vmem:[#allocation10 + $0x20] sm:$0xff] %v213
    %243 = vst [vmem:[#allocation10 + $0x28] sm:$0xff] %v236
    %s244 = scalar_lea.vmem [#allocation5], 16
    %v245 = vld [vmem:[%s244] sm:$0xff]
    %v246 = vld [vmem:[%s244 + $0x8] sm:$0xff]
    %247 = vmatpush.msra.mxu0 0.0
    %248 = vmatpush.msra.mxu0 0.0
    %249 = vmatpush.msra.mxu0 0.0
    %250 = vmatpush.msra.mxu0 0.0
    %251 = vmatpush.msra.mxu0 0.0
    %252 = vmatpush.msra.mxu0 0.0
    %253 = vmatpush.msra.mxu0 0.0
    %254 = vmatpush.msra.mxu0 0.0
    %255 = vmatpush.msra.mxu0 0.0
    %256 = vmatpush.msra.mxu0 0.0
    %257 = vmatpush.msra.mxu0 0.0
    %258 = vmatpush.msra.mxu0 0.0
    %259 = vmatpush.msra.mxu0 0.0
    %260 = vmatpush.msra.mxu0 0.0
    %261 = vmatpush.msra.mxu0 %v246
    %262 = vmatpush.msra.mxu0 %v245
    %263 = vmatmul.f32.gmra.mxu0 %v134
    %v264 = vpop.f32.mrf.mxu0
    %v265 = vadd.f32 0.0, %v264
    %266 = vmatmul.f32.gmra.mxu0 %v137
    %v267 = vpop.f32.mrf.mxu0
    %v268 = vadd.f32 0.0, %v267
    %269 = vdwg.mxu0
    %270 = vmatpush.msra.mxu0 %v126
    %271 = vmatpush.msra.mxu0 %v123
    %272 = vmatpush.msra.mxu0 %v120
    %273 = vmatpush.msra.mxu0 %v117
    %274 = vmatpush.msra.mxu0 %v114
    %275 = vmatpush.msra.mxu0 %v111
    %276 = vmatpush.msra.mxu0 %v108
    %277 = vmatpush.msra.mxu0 %v105
    %278 = vmatpush.msra.mxu0 %v102
    %279 = vmatpush.msra.mxu0 %v99
    %280 = vmatpush.msra.mxu0 %v96
    %281 = vmatpush.msra.mxu0 %v93
    %282 = vmatpush.msra.mxu0 %v90
    %283 = vmatpush.msra.mxu0 %v87
    %284 = vmatpush.msra.mxu0 %v84
    %285 = vmatpush.msra.mxu0 %v81
    %286 = vmatmul.f32.gmra.mxu0 %v265
    %v287 = vpop.f32.mrf.mxu0
    %v288 = vadd.f32 %v163, %v287
    %289 = vmatmul.f32.gmra.mxu0 %v268
    %v290 = vpop.f32.mrf.mxu0
    %v291 = vadd.f32 %v163, %v290
    %292 = vdwg.mxu0
    %293 = vmatpush.msra.mxu0 %v127
    %294 = vmatpush.msra.mxu0 %v124
    %295 = vmatpush.msra.mxu0 %v121
    %296 = vmatpush.msra.mxu0 %v118
    %297 = vmatpush.msra.mxu0 %v115
    %298 = vmatpush.msra.mxu0 %v112
    %299 = vmatpush.msra.mxu0 %v109
    %300 = vmatpush.msra.mxu0 %v106
    %301 = vmatpush.msra.mxu0 %v103
    %302 = vmatpush.msra.mxu0 %v100
    %303 = vmatpush.msra.mxu0 %v97
    %304 = vmatpush.msra.mxu0 %v94
    %305 = vmatpush.msra.mxu0 %v91
    %306 = vmatpush.msra.mxu0 %v88
    %307 = vmatpush.msra.mxu0 %v85
    %308 = vmatpush.msra.mxu0 %v82
    %309 = vmatmul.f32.gmra.mxu0 %v265
    %v310 = vpop.f32.mrf.mxu0
    %v311 = vadd.f32 %v164, %v310
    %312 = vmatmul.f32.gmra.mxu0 %v268
    %v313 = vpop.f32.mrf.mxu0
    %v314 = vadd.f32 %v164, %v313
    %315 = vdwg.mxu0
    %316 = vmatpush.msra.mxu0 %v128
    %317 = vmatpush.msra.mxu0 %v125
    %318 = vmatpush.msra.mxu0 %v122
    %319 = vmatpush.msra.mxu0 %v119
    %320 = vmatpush.msra.mxu0 %v116
    %321 = vmatpush.msra.mxu0 %v113
    %322 = vmatpush.msra.mxu0 %v110
    %323 = vmatpush.msra.mxu0 %v107
    %324 = vmatpush.msra.mxu0 %v104
    %325 = vmatpush.msra.mxu0 %v101
    %326 = vmatpush.msra.mxu0 %v98
    %327 = vmatpush.msra.mxu0 %v95
    %328 = vmatpush.msra.mxu0 %v92
    %329 = vmatpush.msra.mxu0 %v89
    %330 = vmatpush.msra.mxu0 %v86
    %331 = vmatpush.msra.mxu0 %v83
    %332 = vmatmul.f32.gmra.mxu0 %v265
    %v333 = vpop.f32.mrf.mxu0
    %v334 = vadd.f32 %v165, %v333
    %335 = vmatmul.f32.gmra.mxu0 %v268
    %v336 = vpop.f32.mrf.mxu0
    %v337 = vadd.f32 %v165, %v336
    %338 = vdwg.mxu0
    %s339 = scalar_lea.vmem [#allocation10], 48
    %340 = vst [vmem:[%s339] sm:$0xff] %v288
    %341 = vst [vmem:[%s339 + $0x8] sm:$0xff] %v311
    %342 = vst [vmem:[%s339 + $0x10] sm:$0xff] %v334
    %343 = vst [vmem:[%s339 + $0x18] sm:$0xff] %v291
    %344 = vst [vmem:[%s339 + $0x20] sm:$0xff] %v314
    %345 = vst [vmem:[%s339 + $0x28] sm:$0xff] %v337
    %s346 = scalar_lea.vmem [#allocation5], 32
    %v347 = vld [vmem:[%s346] sm:$0xff]
    %v348 = vld [vmem:[%s346 + $0x8] sm:$0xff]
    %349 = vmatpush.msra.mxu0 0.0
    %350 = vmatpush.msra.mxu0 0.0
    %351 = vmatpush.msra.mxu0 0.0
    %352 = vmatpush.msra.mxu0 0.0
    %353 = vmatpush.msra.mxu0 0.0
    %354 = vmatpush.msra.mxu0 0.0
    %355 = vmatpush.msra.mxu0 0.0
    %356 = vmatpush.msra.mxu0 0.0
    %357 = vmatpush.msra.mxu0 0.0
    %358 = vmatpush.msra.mxu0 0.0
    %359 = vmatpush.msra.mxu0 0.0
    %360 = vmatpush.msra.mxu0 0.0
    %361 = vmatpush.msra.mxu0 0.0
    %362 = vmatpush.msra.mxu0 0.0
    %363 = vmatpush.msra.mxu0 %v348
    %364 = vmatpush.msra.mxu0 %v347
    %365 = vmatmul.f32.gmra.mxu0 %v134
    %v366 = vpop.f32.mrf.mxu0
    %v367 = vadd.f32 0.0, %v366
    %368 = vmatmul.f32.gmra.mxu0 %v137
    %v369 = vpop.f32.mrf.mxu0
    %v370 = vadd.f32 0.0, %v369
    %371 = vdwg.mxu0
    %372 = vmatpush.msra.mxu0 %v126
    %373 = vmatpush.msra.mxu0 %v123
    %374 = vmatpush.msra.mxu0 %v120
    %375 = vmatpush.msra.mxu0 %v117
    %376 = vmatpush.msra.mxu0 %v114
    %377 = vmatpush.msra.mxu0 %v111
    %378 = vmatpush.msra.mxu0 %v108
    %379 = vmatpush.msra.mxu0 %v105
    %380 = vmatpush.msra.mxu0 %v102
    %381 = vmatpush.msra.mxu0 %v99
    %382 = vmatpush.msra.mxu0 %v96
    %383 = vmatpush.msra.mxu0 %v93
    %384 = vmatpush.msra.mxu0 %v90
    %385 = vmatpush.msra.mxu0 %v87
    %386 = vmatpush.msra.mxu0 %v84
    %387 = vmatpush.msra.mxu0 %v81
    %388 = vmatmul.f32.gmra.mxu0 %v367
    %v389 = vpop.f32.mrf.mxu0
    %v390 = vadd.f32 %v163, %v389
    %391 = vmatmul.f32.gmra.mxu0 %v370
    %v392 = vpop.f32.mrf.mxu0
    %v393 = vadd.f32 %v163, %v392
    %394 = vdwg.mxu0
    %395 = vmatpush.msra.mxu0 %v127
    %396 = vmatpush.msra.mxu0 %v124
    %397 = vmatpush.msra.mxu0 %v121
    %398 = vmatpush.msra.mxu0 %v118
    %399 = vmatpush.msra.mxu0 %v115
    %400 = vmatpush.msra.mxu0 %v112
    %401 = vmatpush.msra.mxu0 %v109
    %402 = vmatpush.msra.mxu0 %v106
    %403 = vmatpush.msra.mxu0 %v103
    %404 = vmatpush.msra.mxu0 %v100
    %405 = vmatpush.msra.mxu0 %v97
    %406 = vmatpush.msra.mxu0 %v94
    %407 = vmatpush.msra.mxu0 %v91
    %408 = vmatpush.msra.mxu0 %v88
    %409 = vmatpush.msra.mxu0 %v85
    %410 = vmatpush.msra.mxu0 %v82
    %411 = vmatmul.f32.gmra.mxu0 %v367
    %v412 = vpop.f32.mrf.mxu0
    %v413 = vadd.f32 %v164, %v412
    %414 = vmatmul.f32.gmra.mxu0 %v370
    %v415 = vpop.f32.mrf.mxu0
    %v416 = vadd.f32 %v164, %v415
    %417 = vdwg.mxu0
    %418 = vmatpush.msra.mxu0 %v128
    %419 = vmatpush.msra.mxu0 %v125
    %420 = vmatpush.msra.mxu0 %v122
    %421 = vmatpush.msra.mxu0 %v119
    %422 = vmatpush.msra.mxu0 %v116
    %423 = vmatpush.msra.mxu0 %v113
    %424 = vmatpush.msra.mxu0 %v110
    %425 = vmatpush.msra.mxu0 %v107
    %426 = vmatpush.msra.mxu0 %v104
    %427 = vmatpush.msra.mxu0 %v101
    %428 = vmatpush.msra.mxu0 %v98
    %429 = vmatpush.msra.mxu0 %v95
    %430 = vmatpush.msra.mxu0 %v92
    %431 = vmatpush.msra.mxu0 %v89
    %432 = vmatpush.msra.mxu0 %v86
    %433 = vmatpush.msra.mxu0 %v83
    %434 = vmatmul.f32.gmra.mxu0 %v367
    %v435 = vpop.f32.mrf.mxu0
    %v436 = vadd.f32 %v165, %v435
    %437 = vmatmul.f32.gmra.mxu0 %v370
    %v438 = vpop.f32.mrf.mxu0
    %v439 = vadd.f32 %v165, %v438
    %440 = vdwg.mxu0
    %s441 = scalar_lea.vmem [#allocation10], 96
    %442 = vst [vmem:[%s441] sm:$0xff] %v390
    %443 = vst [vmem:[%s441 + $0x8] sm:$0xff] %v413
    %444 = vst [vmem:[%s441 + $0x10] sm:$0xff] %v436
    %445 = vst [vmem:[%s441 + $0x18] sm:$0xff] %v393
    %446 = vst [vmem:[%s441 + $0x20] sm:$0xff] %v416
    %447 = vst [vmem:[%s441 + $0x28] sm:$0xff] %v439
    %s448 = scalar_lea.vmem [#allocation5], 48
    %v449 = vld [vmem:[%s448] sm:$0xff]
    %v450 = vld [vmem:[%s448 + $0x8] sm:$0xff]
    %451 = vmatpush.msra.mxu0 0.0
    %452 = vmatpush.msra.mxu0 0.0
    %453 = vmatpush.msra.mxu0 0.0
    %454 = vmatpush.msra.mxu0 0.0
    %455 = vmatpush.msra.mxu0 0.0
    %456 = vmatpush.msra.mxu0 0.0
    %457 = vmatpush.msra.mxu0 0.0
    %458 = vmatpush.msra.mxu0 0.0
    %459 = vmatpush.msra.mxu0 0.0
    %460 = vmatpush.msra.mxu0 0.0
    %461 = vmatpush.msra.mxu0 0.0
    %462 = vmatpush.msra.mxu0 0.0
    %463 = vmatpush.msra.mxu0 0.0
    %464 = vmatpush.msra.mxu0 0.0
    %465 = vmatpush.msra.mxu0 %v450
    %466 = vmatpush.msra.mxu0 %v449
    %467 = vmatmul.f32.gmra.mxu0 %v134
    %v468 = vpop.f32.mrf.mxu0
    %v469 = vadd.f32 0.0, %v468
    %470 = vmatmul.f32.gmra.mxu0 %v137
    %v471 = vpop.f32.mrf.mxu0
    %v472 = vadd.f32 0.0, %v471
    %473 = vdwg.mxu0
    %474 = vmatpush.msra.mxu0 %v126
    %475 = vmatpush.msra.mxu0 %v123
    %476 = vmatpush.msra.mxu0 %v120
    %477 = vmatpush.msra.mxu0 %v117
    %478 = vmatpush.msra.mxu0 %v114
    %479 = vmatpush.msra.mxu0 %v111
    %480 = vmatpush.msra.mxu0 %v108
    %481 = vmatpush.msra.mxu0 %v105
    %482 = vmatpush.msra.mxu0 %v102
    %483 = vmatpush.msra.mxu0 %v99
    %484 = vmatpush.msra.mxu0 %v96
    %485 = vmatpush.msra.mxu0 %v93
    %486 = vmatpush.msra.mxu0 %v90
    %487 = vmatpush.msra.mxu0 %v87
    %488 = vmatpush.msra.mxu0 %v84
    %489 = vmatpush.msra.mxu0 %v81
    %490 = vmatmul.f32.gmra.mxu0 %v469
    %v491 = vpop.f32.mrf.mxu0
    %v492 = vadd.f32 %v163, %v491
    %493 = vmatmul.f32.gmra.mxu0 %v472
    %v494 = vpop.f32.mrf.mxu0
    %v495 = vadd.f32 %v163, %v494
    %496 = vdwg.mxu0
    %497 = vmatpush.msra.mxu0 %v127
    %498 = vmatpush.msra.mxu0 %v124
    %499 = vmatpush.msra.mxu0 %v121
    %500 = vmatpush.msra.mxu0 %v118
    %501 = vmatpush.msra.mxu0 %v115
    %502 = vmatpush.msra.mxu0 %v112
    %503 = vmatpush.msra.mxu0 %v109
    %504 = vmatpush.msra.mxu0 %v106
    %505 = vmatpush.msra.mxu0 %v103
    %506 = vmatpush.msra.mxu0 %v100
    %507 = vmatpush.msra.mxu0 %v97
    %508 = vmatpush.msra.mxu0 %v94
    %509 = vmatpush.msra.mxu0 %v91
    %510 = vmatpush.msra.mxu0 %v88
    %511 = vmatpush.msra.mxu0 %v85
    %512 = vmatpush.msra.mxu0 %v82
    %513 = vmatmul.f32.gmra.mxu0 %v469
    %v514 = vpop.f32.mrf.mxu0
    %v515 = vadd.f32 %v164, %v514
    %516 = vmatmul.f32.gmra.mxu0 %v472
    %v517 = vpop.f32.mrf.mxu0
    %v518 = vadd.f32 %v164, %v517
    %519 = vdwg.mxu0
    %520 = vmatpush.msra.mxu0 %v128
    %521 = vmatpush.msra.mxu0 %v125
    %522 = vmatpush.msra.mxu0 %v122
    %523 = vmatpush.msra.mxu0 %v119
    %524 = vmatpush.msra.mxu0 %v116
    %525 = vmatpush.msra.mxu0 %v113
    %526 = vmatpush.msra.mxu0 %v110
    %527 = vmatpush.msra.mxu0 %v107
    %528 = vmatpush.msra.mxu0 %v104
    %529 = vmatpush.msra.mxu0 %v101
    %530 = vmatpush.msra.mxu0 %v98
    %531 = vmatpush.msra.mxu0 %v95
    %532 = vmatpush.msra.mxu0 %v92
    %533 = vmatpush.msra.mxu0 %v89
    %534 = vmatpush.msra.mxu0 %v86
    %535 = vmatpush.msra.mxu0 %v83
    %536 = vmatmul.f32.gmra.mxu0 %v469
    %v537 = vpop.f32.mrf.mxu0
    %v538 = vadd.f32 %v165, %v537
    %539 = vmatmul.f32.gmra.mxu0 %v472
    %v540 = vpop.f32.mrf.mxu0
    %v541 = vadd.f32 %v165, %v540
    %542 = vdwg.mxu0
    %s543 = scalar_lea.vmem [#allocation10], 144
    %544 = vst [vmem:[%s543] sm:$0xff] %v492
    %545 = vst [vmem:[%s543 + $0x8] sm:$0xff] %v515
    %546 = vst [vmem:[%s543 + $0x10] sm:$0xff] %v538
    %547 = vst [vmem:[%s543 + $0x18] sm:$0xff] %v495
    %548 = vst [vmem:[%s543 + $0x20] sm:$0xff] %v518
    %549 = vst [vmem:[%s543 + $0x28] sm:$0xff] %v541
    %s550 = scalar_lea.vmem [#allocation5], 64
    %v551 = vld [vmem:[%s550] sm:$0xff]
    %v552 = vld [vmem:[%s550 + $0x8] sm:$0xff]
    %553 = vmatpush.msra.mxu0 0.0
    %554 = vmatpush.msra.mxu0 0.0
    %555 = vmatpush.msra.mxu0 0.0
    %556 = vmatpush.msra.mxu0 0.0
    %557 = vmatpush.msra.mxu0 0.0
    %558 = vmatpush.msra.mxu0 0.0
    %559 = vmatpush.msra.mxu0 0.0
    %560 = vmatpush.msra.mxu0 0.0
    %561 = vmatpush.msra.mxu0 0.0
    %562 = vmatpush.msra.mxu0 0.0
    %563 = vmatpush.msra.mxu0 0.0
    %564 = vmatpush.msra.mxu0 0.0
    %565 = vmatpush.msra.mxu0 0.0
    %566 = vmatpush.msra.mxu0 0.0
    %567 = vmatpush.msra.mxu0 %v552
    %568 = vmatpush.msra.mxu0 %v551
    %569 = vmatmul.f32.gmra.mxu0 %v134
    %v570 = vpop.f32.mrf.mxu0
    %v571 = vadd.f32 0.0, %v570
    %572 = vmatmul.f32.gmra.mxu0 %v137
    %v573 = vpop.f32.mrf.mxu0
    %v574 = vadd.f32 0.0, %v573
    %575 = vdwg.mxu0
    %576 = vmatpush.msra.mxu0 %v126
    %577 = vmatpush.msra.mxu0 %v123
    %578 = vmatpush.msra.mxu0 %v120
    %579 = vmatpush.msra.mxu0 %v117
    %580 = vmatpush.msra.mxu0 %v114
    %581 = vmatpush.msra.mxu0 %v111
    %582 = vmatpush.msra.mxu0 %v108
    %583 = vmatpush.msra.mxu0 %v105
    %584 = vmatpush.msra.mxu0 %v102
    %585 = vmatpush.msra.mxu0 %v99
    %586 = vmatpush.msra.mxu0 %v96
    %587 = vmatpush.msra.mxu0 %v93
    %588 = vmatpush.msra.mxu0 %v90
    %589 = vmatpush.msra.mxu0 %v87
    %590 = vmatpush.msra.mxu0 %v84
    %591 = vmatpush.msra.mxu0 %v81
    %592 = vmatmul.f32.gmra.mxu0 %v571
    %v593 = vpop.f32.mrf.mxu0
    %v594 = vadd.f32 %v163, %v593
    %595 = vmatmul.f32.gmra.mxu0 %v574
    %v596 = vpop.f32.mrf.mxu0
    %v597 = vadd.f32 %v163, %v596
    %598 = vdwg.mxu0
    %599 = vmatpush.msra.mxu0 %v127
    %600 = vmatpush.msra.mxu0 %v124
    %601 = vmatpush.msra.mxu0 %v121
    %602 = vmatpush.msra.mxu0 %v118
    %603 = vmatpush.msra.mxu0 %v115
    %604 = vmatpush.msra.mxu0 %v112
    %605 = vmatpush.msra.mxu0 %v109
    %606 = vmatpush.msra.mxu0 %v106
    %607 = vmatpush.msra.mxu0 %v103
    %608 = vmatpush.msra.mxu0 %v100
    %609 = vmatpush.msra.mxu0 %v97
    %610 = vmatpush.msra.mxu0 %v94
    %611 = vmatpush.msra.mxu0 %v91
    %612 = vmatpush.msra.mxu0 %v88
    %613 = vmatpush.msra.mxu0 %v85
    %614 = vmatpush.msra.mxu0 %v82
    %615 = vmatmul.f32.gmra.mxu0 %v571
    %v616 = vpop.f32.mrf.mxu0
    %v617 = vadd.f32 %v164, %v616
    %618 = vmatmul.f32.gmra.mxu0 %v574
    %v619 = vpop.f32.mrf.mxu0
    %v620 = vadd.f32 %v164, %v619
    %621 = vdwg.mxu0
    %622 = vmatpush.msra.mxu0 %v128
    %623 = vmatpush.msra.mxu0 %v125
    %624 = vmatpush.msra.mxu0 %v122
    %625 = vmatpush.msra.mxu0 %v119
    %626 = vmatpush.msra.mxu0 %v116
    %627 = vmatpush.msra.mxu0 %v113
    %628 = vmatpush.msra.mxu0 %v110
    %629 = vmatpush.msra.mxu0 %v107
    %630 = vmatpush.msra.mxu0 %v104
    %631 = vmatpush.msra.mxu0 %v101
    %632 = vmatpush.msra.mxu0 %v98
    %633 = vmatpush.msra.mxu0 %v95
    %634 = vmatpush.msra.mxu0 %v92
    %635 = vmatpush.msra.mxu0 %v89
    %636 = vmatpush.msra.mxu0 %v86
    %637 = vmatpush.msra.mxu0 %v83
    %638 = vmatmul.f32.gmra.mxu0 %v571
    %v639 = vpop.f32.mrf.mxu0
    %v640 = vadd.f32 %v165, %v639
    %641 = vmatmul.f32.gmra.mxu0 %v574
    %v642 = vpop.f32.mrf.mxu0
    %v643 = vadd.f32 %v165, %v642
    %644 = vdwg.mxu0
    %s645 = scalar_lea.vmem [#allocation10], 192
    %646 = vst [vmem:[%s645] sm:$0xff] %v594
    %647 = vst [vmem:[%s645 + $0x8] sm:$0xff] %v617
    %648 = vst [vmem:[%s645 + $0x10] sm:$0xff] %v640
    %649 = vst [vmem:[%s645 + $0x18] sm:$0xff] %v597
    %650 = vst [vmem:[%s645 + $0x20] sm:$0xff] %v620
    %651 = vst [vmem:[%s645 + $0x28] sm:$0xff] %v643
    %s652 = scalar_lea.vmem [#allocation5], 80
    %v653 = vld [vmem:[%s652] sm:$0xff]
    %v654 = vld [vmem:[%s652 + $0x8] sm:$0xff]
    %655 = vmatpush.msra.mxu0 0.0
    %656 = vmatpush.msra.mxu0 0.0
    %657 = vmatpush.msra.mxu0 0.0
    %658 = vmatpush.msra.mxu0 0.0
    %659 = vmatpush.msra.mxu0 0.0
    %660 = vmatpush.msra.mxu0 0.0
    %661 = vmatpush.msra.mxu0 0.0
    %662 = vmatpush.msra.mxu0 0.0
    %663 = vmatpush.msra.mxu0 0.0
    %664 = vmatpush.msra.mxu0 0.0
    %665 = vmatpush.msra.mxu0 0.0
    %666 = vmatpush.msra.mxu0 0.0
    %667 = vmatpush.msra.mxu0 0.0
    %668 = vmatpush.msra.mxu0 0.0
    %669 = vmatpush.msra.mxu0 %v654
    %670 = vmatpush.msra.mxu0 %v653
    %671 = vmatmul.f32.gmra.mxu0 %v134
    %v672 = vpop.f32.mrf.mxu0
    %v673 = vadd.f32 0.0, %v672
    %674 = vmatmul.f32.gmra.mxu0 %v137
    %v675 = vpop.f32.mrf.mxu0
    %v676 = vadd.f32 0.0, %v675
    %677 = vdwg.mxu0
    %678 = vmatpush.msra.mxu0 %v126
    %679 = vmatpush.msra.mxu0 %v123
    %680 = vmatpush.msra.mxu0 %v120
    %681 = vmatpush.msra.mxu0 %v117
    %682 = vmatpush.msra.mxu0 %v114
    %683 = vmatpush.msra.mxu0 %v111
    %684 = vmatpush.msra.mxu0 %v108
    %685 = vmatpush.msra.mxu0 %v105
    %686 = vmatpush.msra.mxu0 %v102
    %687 = vmatpush.msra.mxu0 %v99
    %688 = vmatpush.msra.mxu0 %v96
    %689 = vmatpush.msra.mxu0 %v93
    %690 = vmatpush.msra.mxu0 %v90
    %691 = vmatpush.msra.mxu0 %v87
    %692 = vmatpush.msra.mxu0 %v84
    %693 = vmatpush.msra.mxu0 %v81
    %694 = vmatmul.f32.gmra.mxu0 %v673
    %v695 = vpop.f32.mrf.mxu0
    %v696 = vadd.f32 %v163, %v695
    %697 = vmatmul.f32.gmra.mxu0 %v676
    %v698 = vpop.f32.mrf.mxu0
    %v699 = vadd.f32 %v163, %v698
    %700 = vdwg.mxu0
    %701 = vmatpush.msra.mxu0 %v127
    %702 = vmatpush.msra.mxu0 %v124
    %703 = vmatpush.msra.mxu0 %v121
    %704 = vmatpush.msra.mxu0 %v118
    %705 = vmatpush.msra.mxu0 %v115
    %706 = vmatpush.msra.mxu0 %v112
    %707 = vmatpush.msra.mxu0 %v109
    %708 = vmatpush.msra.mxu0 %v106
    %709 = vmatpush.msra.mxu0 %v103
    %710 = vmatpush.msra.mxu0 %v100
    %711 = vmatpush.msra.mxu0 %v97
    %712 = vmatpush.msra.mxu0 %v94
    %713 = vmatpush.msra.mxu0 %v91
    %714 = vmatpush.msra.mxu0 %v88
    %715 = vmatpush.msra.mxu0 %v85
    %716 = vmatpush.msra.mxu0 %v82
    %717 = vmatmul.f32.gmra.mxu0 %v673
    %v718 = vpop.f32.mrf.mxu0
    %v719 = vadd.f32 %v164, %v718
    %720 = vmatmul.f32.gmra.mxu0 %v676
    %v721 = vpop.f32.mrf.mxu0
    %v722 = vadd.f32 %v164, %v721
    %723 = vdwg.mxu0
    %724 = vmatpush.msra.mxu0 %v128
    %725 = vmatpush.msra.mxu0 %v125
    %726 = vmatpush.msra.mxu0 %v122
    %727 = vmatpush.msra.mxu0 %v119
    %728 = vmatpush.msra.mxu0 %v116
    %729 = vmatpush.msra.mxu0 %v113
    %730 = vmatpush.msra.mxu0 %v110
    %731 = vmatpush.msra.mxu0 %v107
    %732 = vmatpush.msra.mxu0 %v104
    %733 = vmatpush.msra.mxu0 %v101
    %734 = vmatpush.msra.mxu0 %v98
    %735 = vmatpush.msra.mxu0 %v95
    %736 = vmatpush.msra.mxu0 %v92
    %737 = vmatpush.msra.mxu0 %v89
    %738 = vmatpush.msra.mxu0 %v86
    %739 = vmatpush.msra.mxu0 %v83
    %740 = vmatmul.f32.gmra.mxu0 %v673
    %v741 = vpop.f32.mrf.mxu0
    %v742 = vadd.f32 %v165, %v741
    %743 = vmatmul.f32.gmra.mxu0 %v676
    %v744 = vpop.f32.mrf.mxu0
    %v745 = vadd.f32 %v165, %v744
    %746 = vdwg.mxu0
    %s747 = scalar_lea.vmem [#allocation10], 240
    %748 = vst [vmem:[%s747] sm:$0xff] %v696
    %749 = vst [vmem:[%s747 + $0x8] sm:$0xff] %v719
    %750 = vst [vmem:[%s747 + $0x10] sm:$0xff] %v742
    %751 = vst [vmem:[%s747 + $0x18] sm:$0xff] %v699
    %752 = vst [vmem:[%s747 + $0x20] sm:$0xff] %v722
    %753 = vst [vmem:[%s747 + $0x28] sm:$0xff] %v745
    %s754 = scalar_lea.vmem [#allocation5], 96
    %v755 = vld [vmem:[%s754] sm:$0xff]
    %v756 = vld [vmem:[%s754 + $0x8] sm:$0xff]
    %757 = vmatpush.msra.mxu0 0.0
    %758 = vmatpush.msra.mxu0 0.0
    %759 = vmatpush.msra.mxu0 0.0
    %760 = vmatpush.msra.mxu0 0.0
    %761 = vmatpush.msra.mxu0 0.0
    %762 = vmatpush.msra.mxu0 0.0
    %763 = vmatpush.msra.mxu0 0.0
    %764 = vmatpush.msra.mxu0 0.0
    %765 = vmatpush.msra.mxu0 0.0
    %766 = vmatpush.msra.mxu0 0.0
    %767 = vmatpush.msra.mxu0 0.0
    %768 = vmatpush.msra.mxu0 0.0
    %769 = vmatpush.msra.mxu0 0.0
    %770 = vmatpush.msra.mxu0 0.0
    %771 = vmatpush.msra.mxu0 %v756
    %772 = vmatpush.msra.mxu0 %v755
    %773 = vmatmul.f32.gmra.mxu0 %v134
    %v774 = vpop.f32.mrf.mxu0
    %v775 = vadd.f32 0.0, %v774
    %776 = vmatmul.f32.gmra.mxu0 %v137
    %v777 = vpop.f32.mrf.mxu0
    %v778 = vadd.f32 0.0, %v777
    %779 = vdwg.mxu0
    %780 = vmatpush.msra.mxu0 %v126
    %781 = vmatpush.msra.mxu0 %v123
    %782 = vmatpush.msra.mxu0 %v120
    %783 = vmatpush.msra.mxu0 %v117
    %784 = vmatpush.msra.mxu0 %v114
    %785 = vmatpush.msra.mxu0 %v111
    %786 = vmatpush.msra.mxu0 %v108
    %787 = vmatpush.msra.mxu0 %v105
    %788 = vmatpush.msra.mxu0 %v102
    %789 = vmatpush.msra.mxu0 %v99
    %790 = vmatpush.msra.mxu0 %v96
    %791 = vmatpush.msra.mxu0 %v93
    %792 = vmatpush.msra.mxu0 %v90
    %793 = vmatpush.msra.mxu0 %v87
    %794 = vmatpush.msra.mxu0 %v84
    %795 = vmatpush.msra.mxu0 %v81
    %796 = vmatmul.f32.gmra.mxu0 %v775
    %v797 = vpop.f32.mrf.mxu0
    %v798 = vadd.f32 %v163, %v797
    %799 = vmatmul.f32.gmra.mxu0 %v778
    %v800 = vpop.f32.mrf.mxu0
    %v801 = vadd.f32 %v163, %v800
    %802 = vdwg.mxu0
    %803 = vmatpush.msra.mxu0 %v127
    %804 = vmatpush.msra.mxu0 %v124
    %805 = vmatpush.msra.mxu0 %v121
    %806 = vmatpush.msra.mxu0 %v118
    %807 = vmatpush.msra.mxu0 %v115
    %808 = vmatpush.msra.mxu0 %v112
    %809 = vmatpush.msra.mxu0 %v109
    %810 = vmatpush.msra.mxu0 %v106
    %811 = vmatpush.msra.mxu0 %v103
    %812 = vmatpush.msra.mxu0 %v100
    %813 = vmatpush.msra.mxu0 %v97
    %814 = vmatpush.msra.mxu0 %v94
    %815 = vmatpush.msra.mxu0 %v91
    %816 = vmatpush.msra.mxu0 %v88
    %817 = vmatpush.msra.mxu0 %v85
    %818 = vmatpush.msra.mxu0 %v82
    %819 = vmatmul.f32.gmra.mxu0 %v775
    %v820 = vpop.f32.mrf.mxu0
    %v821 = vadd.f32 %v164, %v820
    %822 = vmatmul.f32.gmra.mxu0 %v778
    %v823 = vpop.f32.mrf.mxu0
    %v824 = vadd.f32 %v164, %v823
    %825 = vdwg.mxu0
    %826 = vmatpush.msra.mxu0 %v128
    %827 = vmatpush.msra.mxu0 %v125
    %828 = vmatpush.msra.mxu0 %v122
    %829 = vmatpush.msra.mxu0 %v119
    %830 = vmatpush.msra.mxu0 %v116
    %831 = vmatpush.msra.mxu0 %v113
    %832 = vmatpush.msra.mxu0 %v110
    %833 = vmatpush.msra.mxu0 %v107
    %834 = vmatpush.msra.mxu0 %v104
    %835 = vmatpush.msra.mxu0 %v101
    %836 = vmatpush.msra.mxu0 %v98
    %837 = vmatpush.msra.mxu0 %v95
    %838 = vmatpush.msra.mxu0 %v92
    %839 = vmatpush.msra.mxu0 %v89
    %840 = vmatpush.msra.mxu0 %v86
    %841 = vmatpush.msra.mxu0 %v83
    %842 = vmatmul.f32.gmra.mxu0 %v775
    %v843 = vpop.f32.mrf.mxu0
    %v844 = vadd.f32 %v165, %v843
    %845 = vmatmul.f32.gmra.mxu0 %v778
    %v846 = vpop.f32.mrf.mxu0
    %v847 = vadd.f32 %v165, %v846
    %848 = vdwg.mxu0
    %s849 = scalar_lea.vmem [#allocation10], 288
    %850 = vst [vmem:[%s849] sm:$0xff] %v798
    %851 = vst [vmem:[%s849 + $0x8] sm:$0xff] %v821
    %852 = vst [vmem:[%s849 + $0x10] sm:$0xff] %v844
    %853 = vst [vmem:[%s849 + $0x18] sm:$0xff] %v801
    %854 = vst [vmem:[%s849 + $0x20] sm:$0xff] %v824
    %855 = vst [vmem:[%s849 + $0x28] sm:$0xff] %v847
    %s856 = scalar_lea.vmem [#allocation5], 112
    %v857 = vld [vmem:[%s856] sm:$0xff]
    %v858 = vld [vmem:[%s856 + $0x8] sm:$0xff]
    %859 = vmatpush.msra.mxu0 0.0
    %860 = vmatpush.msra.mxu0 0.0
    %861 = vmatpush.msra.mxu0 0.0
    %862 = vmatpush.msra.mxu0 0.0
    %863 = vmatpush.msra.mxu0 0.0
    %864 = vmatpush.msra.mxu0 0.0
    %865 = vmatpush.msra.mxu0 0.0
    %866 = vmatpush.msra.mxu0 0.0
    %867 = vmatpush.msra.mxu0 0.0
    %868 = vmatpush.msra.mxu0 0.0
    %869 = vmatpush.msra.mxu0 0.0
    %870 = vmatpush.msra.mxu0 0.0
    %871 = vmatpush.msra.mxu0 0.0
    %872 = vmatpush.msra.mxu0 0.0
    %873 = vmatpush.msra.mxu0 %v858
    %874 = vmatpush.msra.mxu0 %v857
    %875 = vmatmul.f32.gmra.mxu0 %v134
    %v876 = vpop.f32.mrf.mxu0
    %v877 = vadd.f32 0.0, %v876
    %878 = vmatmul.f32.gmra.mxu0 %v137
    %v879 = vpop.f32.mrf.mxu0
    %v880 = vadd.f32 0.0, %v879
    %881 = vdwg.mxu0
    %882 = vmatpush.msra.mxu0 %v126
    %883 = vmatpush.msra.mxu0 %v123
    %884 = vmatpush.msra.mxu0 %v120
    %885 = vmatpush.msra.mxu0 %v117
    %886 = vmatpush.msra.mxu0 %v114
    %887 = vmatpush.msra.mxu0 %v111
    %888 = vmatpush.msra.mxu0 %v108
    %889 = vmatpush.msra.mxu0 %v105
    %890 = vmatpush.msra.mxu0 %v102
    %891 = vmatpush.msra.mxu0 %v99
    %892 = vmatpush.msra.mxu0 %v96
    %893 = vmatpush.msra.mxu0 %v93
    %894 = vmatpush.msra.mxu0 %v90
    %895 = vmatpush.msra.mxu0 %v87
    %896 = vmatpush.msra.mxu0 %v84
    %897 = vmatpush.msra.mxu0 %v81
    %898 = vmatmul.f32.gmra.mxu0 %v877
    %v899 = vpop.f32.mrf.mxu0
    %v900 = vadd.f32 %v163, %v899
    %901 = vmatmul.f32.gmra.mxu0 %v880
    %v902 = vpop.f32.mrf.mxu0
    %v903 = vadd.f32 %v163, %v902
    %904 = vdwg.mxu0
    %905 = vmatpush.msra.mxu0 %v127
    %906 = vmatpush.msra.mxu0 %v124
    %907 = vmatpush.msra.mxu0 %v121
    %908 = vmatpush.msra.mxu0 %v118
    %909 = vmatpush.msra.mxu0 %v115
    %910 = vmatpush.msra.mxu0 %v112
    %911 = vmatpush.msra.mxu0 %v109
    %912 = vmatpush.msra.mxu0 %v106
    %913 = vmatpush.msra.mxu0 %v103
    %914 = vmatpush.msra.mxu0 %v100
    %915 = vmatpush.msra.mxu0 %v97
    %916 = vmatpush.msra.mxu0 %v94
    %917 = vmatpush.msra.mxu0 %v91
    %918 = vmatpush.msra.mxu0 %v88
    %919 = vmatpush.msra.mxu0 %v85
    %920 = vmatpush.msra.mxu0 %v82
    %921 = vmatmul.f32.gmra.mxu0 %v877
    %v922 = vpop.f32.mrf.mxu0
    %v923 = vadd.f32 %v164, %v922
    %924 = vmatmul.f32.gmra.mxu0 %v880
    %v925 = vpop.f32.mrf.mxu0
    %v926 = vadd.f32 %v164, %v925
    %927 = vdwg.mxu0
    %928 = vmatpush.msra.mxu0 %v128
    %929 = vmatpush.msra.mxu0 %v125
    %930 = vmatpush.msra.mxu0 %v122
    %931 = vmatpush.msra.mxu0 %v119
    %932 = vmatpush.msra.mxu0 %v116
    %933 = vmatpush.msra.mxu0 %v113
    %934 = vmatpush.msra.mxu0 %v110
    %935 = vmatpush.msra.mxu0 %v107
    %936 = vmatpush.msra.mxu0 %v104
    %937 = vmatpush.msra.mxu0 %v101
    %938 = vmatpush.msra.mxu0 %v98
    %939 = vmatpush.msra.mxu0 %v95
    %940 = vmatpush.msra.mxu0 %v92
    %941 = vmatpush.msra.mxu0 %v89
    %942 = vmatpush.msra.mxu0 %v86
    %943 = vmatpush.msra.mxu0 %v83
    %944 = vmatmul.f32.gmra.mxu0 %v877
    %v945 = vpop.f32.mrf.mxu0
    %v946 = vadd.f32 %v165, %v945
    %947 = vmatmul.f32.gmra.mxu0 %v880
    %v948 = vpop.f32.mrf.mxu0
    %v949 = vadd.f32 %v165, %v948
    %950 = vdwg.mxu0
    %s951 = scalar_lea.vmem [#allocation10], 336
    %952 = vst [vmem:[%s951] sm:$0xff] %v900
    %953 = vst [vmem:[%s951 + $0x8] sm:$0xff] %v923
    %954 = vst [vmem:[%s951 + $0x10] sm:$0xff] %v946
    %955 = vst [vmem:[%s951 + $0x18] sm:$0xff] %v903
    %956 = vst [vmem:[%s951 + $0x20] sm:$0xff] %v926
    %957 = vst [vmem:[%s951 + $0x28] sm:$0xff] %v949
    // Predicated region
    $region34: #{tpu_custom_call.1} parent=1 // pred_check
      _
    $region35: #{tpu_custom_call.1} parent=1 // pred_check_branch
      %959 = sbr.rel (0) target = $region37
    $region36: #{tpu_custom_call.1} parent=1 // pred_region
      %961 = vsyncadd [#allocation4], 0
      %s962 = sshll.u32 [#allocation10], 4
      %s963 = int_to_ptr.vmem [resolvable:$true] %s962
      %s964 = sshll.u32 %s4, 4
      %s965 = int_to_ptr.hbm [resolvable:$true] %s964
      %970 = dma.vmem_to_hbm [thread:$0]  %s963, 6144, %s965, [#allocation4], 384, 384, 24
    $region37: #{tpu_custom_call.1} parent=1 // pred_fallthru
      _
    // Predicated region
    $region38: #{tpu_custom_call.1} parent=1 // pred_check
      _
    $region39: #{tpu_custom_call.1} parent=1 // pred_check_branch
      %972 = sbr.rel (0) target = $region41
    $region40: #{tpu_custom_call.1} parent=1 // pred_region
      %974 = dma.done [#allocation4], 6144
    $region41: #{tpu_custom_call.1} parent=1 // pred_fallthru
      _
    %975 = vsyncpa [#allocation3], 1
    %976 = vsyncpa [#allocation6], 1
    %977 = vsyncpa [#allocation9], 1
    %978 = vsyncpa [#allocation4], 1

</llo_original>
